<compile_context>
chip_gen: v6e
topology: v6e:2x2x1
jax: 0.10.0
libtpu: 0.0.40
codegen_flags: <defaults>
</compile_context>

<pallas_src>
import numpy as np
import jax
import jax.numpy as jnp
from jax.experimental import pallas as pl
from jax.experimental.pallas import tpu as pltpu

# ---------------------------------------------------------------------------
# JPEG constants (same values the reference module's y_table / c_table hold).
_Y_TABLE_NP = np.array(
    [[16, 11, 10, 16, 24, 40, 51, 61], [12, 12, 14, 19, 26, 58, 60, 55],
     [14, 13, 16, 24, 40, 57, 69, 56], [14, 17, 22, 29, 51, 87, 80, 62],
     [18, 22, 37, 56, 68, 109, 103, 77], [24, 35, 55, 64, 81, 104, 113, 92],
     [49, 64, 78, 87, 103, 121, 120, 101], [72, 92, 95, 98, 112, 100, 103, 99]],
    dtype=np.float32).T

_C_TABLE_NP = np.full((8, 8), 99, dtype=np.float32)
_C_TABLE_NP[:4, :4] = np.array(
    [[17, 18, 24, 47], [18, 21, 26, 66], [24, 26, 56, 99], [47, 66, 99, 99]],
    dtype=np.float32).T

_LANES = 128  # two 8x8 blocks packed per lane-dense row


def quality_to_factor(quality):
    """Same mapping JpegDiff.__init__ uses (quality=80 -> factor=0.4)."""
    if quality < 50:
        quality = 5000.0 / quality
    else:
        quality = 200.0 - quality * 2
    return quality / 100.0


def _build_transform_mats(table_np, factor):
    """Fold DCT scale, quant table*factor, IDCT alpha and the 0.25 into two
    128x128 block-diagonal matrices (2 blocks per 128-lane row):
        q   = (x_spatial - 128) @ A        (quantized coefficients)
        out = diff_round(q) @ B + 128      (reconstructed spatial block)
    """
    idx = np.arange(8, dtype=np.float64)
    cosm = np.cos((2.0 * idx[:, None] + 1.0) * idx[None, :] * np.pi / 16.0)  # [x,u]
    t_dct = np.einsum("xu,yv->xyuv", cosm, cosm).reshape(64, 64)   # (x,y)->(u,v)
    t_idct = np.einsum("xu,yv->uvxy", cosm, cosm).reshape(64, 64)  # (u,v)->(x,y)
    alpha = np.array([1.0 / np.sqrt(2.0)] + [1.0] * 7)
    dct_scale = (np.outer(alpha, alpha) * 0.25).reshape(64)        # dct_8x8.scale
    idct_alpha = np.outer(alpha, alpha).reshape(64)                # idct_8x8.alpha
    qt = table_np.astype(np.float64).reshape(64) * float(factor)

    a64 = t_dct * (dct_scale / qt)[None, :]
    b64 = (qt * idct_alpha)[:, None] * t_idct * 0.25
    a128 = np.kron(np.eye(2), a64)
    b128 = np.kron(np.eye(2), b64)
    return (jnp.asarray(a128, dtype=jnp.float32),
            jnp.asarray(b128, dtype=jnp.float32))


def _choose_tm(rows, cap):
    """Tile rows: full-extent for tiny inputs, otherwise a multiple of 8 that
    keeps >= 2 grid steps (v7x megacore) and <= cap rows per step."""
    if rows <= 8:
        return rows
    tm = min(cap, ((rows + 15) // 16) * 8)
    return max(8, tm)


# ---------------------------------------------------------------------------
# Kernels
def _rgb_to_ycc_kernel(r_ref, g_ref, b_ref, y_ref, cb_ref, cr_ref):
    r = (jnp.clip(r_ref[...], -1.0, 1.0) + 1.0) * 127.5
    g = (jnp.clip(g_ref[...], -1.0, 1.0) + 1.0) * 127.5
    b = (jnp.clip(b_ref[...], -1.0, 1.0) + 1.0) * 127.5
    y_ref[...] = 0.299 * r + 0.587 * g + 0.114 * b
    cb_ref[...] = -0.168736 * r - 0.331264 * g + 0.5 * b + 128.0
    cr_ref[...] = 0.5 * r - 0.418688 * g - 0.081312 * b + 128.0


def _ycc_to_rgb_kernel(y_ref, cb_ref, cr_ref, r_ref, g_ref, b_ref):
    y = y_ref[...]
    cb = cb_ref[...] - 128.0
    cr = cr_ref[...] - 128.0
    inv = 1.0 / 127.5
    r = y + 1.402 * cr
    g = y - 0.344136 * cb - 0.714136 * cr
    b = y + 1.772 * cb
    # clamp to [0,255], /255, then the JpegDiff *2-1  ==  clamp/127.5 - 1
    r_ref[...] = jnp.clip(r, 0.0, 255.0) * inv - 1.0
    g_ref[...] = jnp.clip(g, 0.0, 255.0) * inv - 1.0
    b_ref[...] = jnp.clip(b, 0.0, 255.0) * inv - 1.0


def _jpeg_block_kernel(x_ref, a_ref, b_ref, o_ref):
    # DCT + quantize (folded into A), differentiable round, dequantize + IDCT
    # (folded into B).  x/o rows hold 2 packed 8x8 blocks (128 lanes).
    q = jnp.dot(x_ref[...] - 128.0, a_ref[...],
                preferred_element_type=jnp.float32)
    r = jnp.round(q)
    q = r + (q - r) ** 3
    o_ref[...] = (jnp.dot(q, b_ref[...], preferred_element_type=jnp.float32)
                  + 128.0).astype(o_ref.dtype)


# ---------------------------------------------------------------------------
# Launchers
def _run_planes_kernel(kernel, planes, cap=512):
    rows, lanes = planes[0].shape
    tm = _choose_tm(rows, cap)
    spec = pl.BlockSpec((tm, lanes), lambda i: (i, 0))
    shape = jax.ShapeDtypeStruct((rows, lanes), planes[0].dtype)
    return pl.pallas_call(
        kernel,
        out_shape=(shape, shape, shape),
        grid=(pl.cdiv(rows, tm),),
        in_specs=[spec, spec, spec],
        out_specs=(spec, spec, spec),
        input_output_aliases={0: 0, 1: 1, 2: 2},   # in-place over the planes
        compiler_params=pltpu.CompilerParams(
            dimension_semantics=("parallel",)),
    )(*planes)


def _run_block_pipeline(blocks2d, a_mat, b_mat, cap=1024):
    rows, lanes = blocks2d.shape
    tm = _choose_tm(rows, cap)
    return pl.pallas_call(
        _jpeg_block_kernel,
        out_shape=jax.ShapeDtypeStruct((rows, lanes), blocks2d.dtype),
        grid=(pl.cdiv(rows, tm),),
        in_specs=[
            pl.BlockSpec((tm, lanes), lambda i: (i, 0)),
            # constant block index -> folded transform matrices stay VMEM-resident
            pl.BlockSpec((lanes, lanes), lambda i: (0, 0)),
            pl.BlockSpec((lanes, lanes), lambda i: (0, 0)),
        ],
        out_specs=pl.BlockSpec((tm, lanes), lambda i: (i, 0)),
        input_output_aliases={0: 0},               # blocks transformed in place
        compiler_params=pltpu.CompilerParams(
            dimension_semantics=("parallel",)),
    )(blocks2d, a_mat, b_mat)


# ---------------------------------------------------------------------------
# Layout helpers (XLA reshapes only)
def _split_blocks(plane):            # (B, h, w) -> (B*h*w/64, 64)
    b, h, w = plane.shape
    x = plane.reshape(b, h // 8, 8, w // 8, 8)
    x = jnp.transpose(x, (0, 1, 3, 2, 4))
    return x.reshape(b * (h // 8) * (w // 8), 64)


def _merge_blocks(blocks, b, h, w):  # (B*h*w/64, 64) -> (B, h, w)
    x = blocks.reshape(b, h // 8, w // 8, 8, 8)
    x = jnp.transpose(x, (0, 1, 3, 2, 4))
    return x.reshape(b, h, w)


# ---------------------------------------------------------------------------
# Full JpegDiff forward
def jpeg_diff_forward(image, quality=80):
    """image: (B, 3, H, W) in [-1, 1]; returns the JPEG'd image in [-1, 1]."""
    b, c, h, w = image.shape
    assert c == 3 and h % 16 == 0 and w % 16 == 0
    factor = quality_to_factor(quality)
    a_y, b_y = _build_transform_mats(_Y_TABLE_NP, factor)
    a_c, b_c = _build_transform_mats(_C_TABLE_NP, factor)

    rows_full = (b * h * w) // _LANES

    # --- clip + [0,255] + RGB->YCbCr (fused elementwise kernel) ---
    r = image[:, 0].reshape(rows_full, _LANES)
    g = image[:, 1].reshape(rows_full, _LANES)
    bb = image[:, 2].reshape(rows_full, _LANES)
    y2, cb2, cr2 = _run_planes_kernel(_rgb_to_ycc_kernel, (r, g, bb))
    y_plane = y2.reshape(b, h, w)
    cb_full = cb2.reshape(b, h, w)
    cr_full = cr2.reshape(b, h, w)

    # --- chroma 2x2 average pooling (layout op) ---
    cb_s = cb_full.reshape(b, h // 2, 2, w // 2, 2).mean(axis=(2, 4))
    cr_s = cr_full.reshape(b, h // 2, 2, w // 2, 2).mean(axis=(2, 4))

    # --- luma: DCT -> quant -> diff_round -> dequant -> IDCT (one kernel) ---
    y_blocks = _split_blocks(y_plane)
    my = y_blocks.shape[0]
    y_out = _run_block_pipeline(y_blocks.reshape(my // 2, _LANES), a_y, b_y)
    y_rec = _merge_blocks(y_out.reshape(my, 64), b, h, w)

    # --- chroma: cb and cr share the c-table -> single fused call ---
    c_blocks = jnp.concatenate([_split_blocks(cb_s), _split_blocks(cr_s)], axis=0)
    mc = c_blocks.shape[0]
    c_out = _run_block_pipeline(c_blocks.reshape(mc // 2, _LANES), a_c, b_c)
    c_out = c_out.reshape(mc, 64)
    cb_rec = _merge_blocks(c_out[: mc // 2], b, h // 2, w // 2)
    cr_rec = _merge_blocks(c_out[mc // 2:], b, h // 2, w // 2)

    # --- chroma nearest-neighbour 2x upsample (layout op) ---
    cb_up = jnp.repeat(jnp.repeat(cb_rec, 2, axis=1), 2, axis=2)
    cr_up = jnp.repeat(jnp.repeat(cr_rec, 2, axis=1), 2, axis=2)

    # --- YCbCr->RGB + clamp + rescale to [-1,1] (fused elementwise kernel) ---
    ro, go, bo = _run_planes_kernel(
        _ycc_to_rgb_kernel,
        (y_rec.reshape(rows_full, _LANES),
         cb_up.reshape(rows_full, _LANES),
         cr_up.reshape(rows_full, _LANES)))

    return jnp.stack([ro.reshape(b, h, w), go.reshape(b, h, w),
                      bo.reshape(b, h, w)], axis=1)


jpeg_diff = jax.jit(jpeg_diff_forward, static_argnames=("quality",))


# ---------------------------------------------------------------------------
# Pure-JAX reference following the torch module structure (for validation).
def _reference_forward(image, quality=80):
    hp = jax.lax.Precision.HIGHEST
    factor = quality_to_factor(quality)
    b, _, h, w = image.shape
    img = (jnp.clip(image, -1.0, 1.0) + 1.0) / 2.0 * 255.0
    img = jnp.transpose(img, (0, 2, 3, 1))

    m_fwd = jnp.asarray(np.array(
        [[0.299, 0.587, 0.114], [-0.168736, -0.331264, 0.5],
         [0.5, -0.418688, -0.081312]], dtype=np.float32).T)
    ycc = jnp.einsum("bhwk,kc->bhwc", img, m_fwd, precision=hp) \
        + jnp.array([0.0, 128.0, 128.0], jnp.float32)

    idx = np.arange(8, dtype=np.float64)
    cosm = np.cos((2.0 * idx[:, None] + 1.0) * idx[None, :] * np.pi / 16.0)
    dct_t = jnp.asarray(np.einsum("xu,yv->xyuv", cosm, cosm), jnp.float32)
    idct_t = jnp.asarray(np.einsum("xu,yv->uvxy", cosm, cosm), jnp.float32)
    alpha = np.array([1.0 / np.sqrt(2.0)] + [1.0] * 7)
    dct_scale = jnp.asarray(np.outer(alpha, alpha) * 0.25, jnp.float32)
    idct_alpha = jnp.asarray(np.outer(alpha, alpha), jnp.float32)

    def comp(plane, table_np):
        bb, hh, ww = plane.shape
        blk = _split_blocks(plane).reshape(-1, 8, 8)
        table = jnp.asarray(table_np)
        d = jnp.einsum("nxy,xyuv->nuv", blk - 128.0, dct_t, precision=hp) * dct_scale
        q = d / (table * factor)
        qr = jnp.round(q)
        q = qr + (q - qr) ** 3
        dq = q * (table * factor)
        rec = 0.25 * jnp.einsum("nuv,uvxy->nxy", dq * idct_alpha, idct_t,
                                precision=hp) + 128.0
        return _merge_blocks(rec.reshape(-1, 64), bb, hh, ww)

    y = ycc[..., 0]
    cb = ycc[..., 1].reshape(b, h // 2, 2, w // 2, 2).mean(axis=(2, 4))
    cr = ycc[..., 2].reshape(b, h // 2, 2, w // 2, 2).mean(axis=(2, 4))
    y_r = comp(y, _Y_TABLE_NP)
    cb_r = comp(cb, _C_TABLE_NP)
    cr_r = comp(cr, _C_TABLE_NP)
    cb_u = jnp.repeat(jnp.repeat(cb_r, 2, axis=1), 2, axis=2)
    cr_u = jnp.repeat(jnp.repeat(cr_r, 2, axis=1), 2, axis=2)

    img2 = jnp.stack([y_r, cb_u, cr_u], axis=-1)
    m_bwd = jnp.asarray(np.array(
        [[1.0, 0.0, 1.402], [1.0, -0.344136, -0.714136],
         [1.0, 1.772, 0.0]], dtype=np.float32).T)
    rgb = jnp.einsum("bhwk,kc->bhwc",
                     img2 + jnp.array([0.0, -128.0, -128.0], jnp.float32),
                     m_bwd, precision=hp)
    rgb = jnp.clip(rgb, 0.0, 255.0) / 255.0
    return jnp.transpose(rgb, (0, 3, 1, 2)) * 2.0 - 1.0


_reference = jax.jit(_reference_forward, static_argnames=("quality",))


# ---------------------------------------------------------------------------
if __name__ == "__main__":
    def _check(x):
        out = jax.block_until_ready(jpeg_diff(x))
        ref = jax.block_until_ready(_reference(x))
        assert out.shape == x.shape and out.dtype == x.dtype
        mean_err = float(jnp.mean(jnp.abs(out - ref)))
        max_err = float(jnp.max(jnp.abs(out - ref)))
        # diff_round is discontinuous at half-integers, so allow a rare single
        # coefficient flip from f32 accumulation-order differences.
        assert mean_err < 3e-3 and max_err < 0.25, (mean_err, max_err)

    key = jax.random.PRNGKey(0)
    # batch=2, 3-channel 16x16 images in (just beyond) [-1, 1]; quality=80.
    x = jax.random.uniform(key, (2, 3, 16, 16), jnp.float32,
                           minval=-1.2, maxval=1.2)
    _check(x)

    # Larger, ragged-tile case: exercises multi-step grids and a partial
    # (non-multiple-of-8-rows) last block with no wrapper-side padding.
    x2 = jax.random.uniform(jax.random.PRNGKey(0), (1, 3, 32, 48), jnp.float32,
                            minval=-1.0, maxval=1.0)
    _check(x2)

    print("KERNEL_OK")
</pallas_src>

<mosaic_0001>
module attributes {stable_mosaic.version = 11 : i64} {
  func.func @_rgb_to_ycc_kernel(%arg0: i32, %arg1: memref<4x128xf32, #tpu.memory_space<vmem>>, %arg2: memref<4x128xf32, #tpu.memory_space<vmem>>, %arg3: memref<4x128xf32, #tpu.memory_space<vmem>>, %arg4: memref<4x128xf32, #tpu.memory_space<vmem>>, %arg5: memref<4x128xf32, #tpu.memory_space<vmem>>, %arg6: memref<4x128xf32, #tpu.memory_space<vmem>>) attributes {dimension_semantics = [#tpu.dimension_semantics<parallel>], iteration_bounds = array<i64: 1>, scalar_prefetch = 0 : i64, scratch_operands = 0 : i64, tpu.core_type = #tpu.core_type<tc>, window_params = [{transform_indices = @transform_0, window_bounds = array<i64: 4, 128>}, {transform_indices = @transform_1, window_bounds = array<i64: 4, 128>}, {transform_indices = @transform_2, window_bounds = array<i64: 4, 128>}, {transform_indices = @transform_3, window_bounds = array<i64: 4, 128>}, {transform_indices = @transform_4, window_bounds = array<i64: 4, 128>}, {transform_indices = @transform_5, window_bounds = array<i64: 4, 128>}]} {
    %c0 = arith.constant 0 : index
    %c0_0 = arith.constant 0 : index
    %0 = vector.load %arg1[%c0, %c0_0] : memref<4x128xf32, #tpu.memory_space<vmem>>, vector<4x128xf32>
    %cst = arith.constant -1.000000e+00 : f32
    %cst_1 = arith.constant 1.000000e+00 : f32
    %1 = vector.broadcast %cst : f32 to vector<4x128xf32>
    %2 = arith.maximumf %1, %0 : vector<4x128xf32>
    %3 = vector.broadcast %cst_1 : f32 to vector<4x128xf32>
    %4 = arith.minimumf %3, %2 : vector<4x128xf32>
    %cst_2 = arith.constant 1.000000e+00 : f32
    %5 = vector.broadcast %cst_2 : f32 to vector<4x128xf32>
    %6 = arith.addf %4, %5 : vector<4x128xf32>
    %cst_3 = arith.constant 1.275000e+02 : f32
    %7 = vector.broadcast %cst_3 : f32 to vector<4x128xf32>
    %8 = arith.mulf %6, %7 : vector<4x128xf32>
    %c0_4 = arith.constant 0 : index
    %c0_5 = arith.constant 0 : index
    %9 = vector.load %arg2[%c0_4, %c0_5] : memref<4x128xf32, #tpu.memory_space<vmem>>, vector<4x128xf32>
    %cst_6 = arith.constant -1.000000e+00 : f32
    %cst_7 = arith.constant 1.000000e+00 : f32
    %10 = vector.broadcast %cst_6 : f32 to vector<4x128xf32>
    %11 = arith.maximumf %10, %9 : vector<4x128xf32>
    %12 = vector.broadcast %cst_7 : f32 to vector<4x128xf32>
    %13 = arith.minimumf %12, %11 : vector<4x128xf32>
    %cst_8 = arith.constant 1.000000e+00 : f32
    %14 = vector.broadcast %cst_8 : f32 to vector<4x128xf32>
    %15 = arith.addf %13, %14 : vector<4x128xf32>
    %cst_9 = arith.constant 1.275000e+02 : f32
    %16 = vector.broadcast %cst_9 : f32 to vector<4x128xf32>
    %17 = arith.mulf %15, %16 : vector<4x128xf32>
    %c0_10 = arith.constant 0 : index
    %c0_11 = arith.constant 0 : index
    %18 = vector.load %arg3[%c0_10, %c0_11] : memref<4x128xf32, #tpu.memory_space<vmem>>, vector<4x128xf32>
    %cst_12 = arith.constant -1.000000e+00 : f32
    %cst_13 = arith.constant 1.000000e+00 : f32
    %19 = vector.broadcast %cst_12 : f32 to vector<4x128xf32>
    %20 = arith.maximumf %19, %18 : vector<4x128xf32>
    %21 = vector.broadcast %cst_13 : f32 to vector<4x128xf32>
    %22 = arith.minimumf %21, %20 : vector<4x128xf32>
    %cst_14 = arith.constant 1.000000e+00 : f32
    %23 = vector.broadcast %cst_14 : f32 to vector<4x128xf32>
    %24 = arith.addf %22, %23 : vector<4x128xf32>
    %cst_15 = arith.constant 1.275000e+02 : f32
    %25 = vector.broadcast %cst_15 : f32 to vector<4x128xf32>
    %26 = arith.mulf %24, %25 : vector<4x128xf32>
    %cst_16 = arith.constant 2.990000e-01 : f32
    %27 = vector.broadcast %cst_16 : f32 to vector<4x128xf32>
    %28 = arith.mulf %27, %8 : vector<4x128xf32>
    %cst_17 = arith.constant 5.870000e-01 : f32
    %29 = vector.broadcast %cst_17 : f32 to vector<4x128xf32>
    %30 = arith.mulf %29, %17 : vector<4x128xf32>
    %31 = arith.addf %28, %30 : vector<4x128xf32>
    %cst_18 = arith.constant 1.140000e-01 : f32
    %32 = vector.broadcast %cst_18 : f32 to vector<4x128xf32>
    %33 = arith.mulf %32, %26 : vector<4x128xf32>
    %34 = arith.addf %31, %33 : vector<4x128xf32>
    %c0_19 = arith.constant 0 : index
    %c0_20 = arith.constant 0 : index
    %35 = vector.load %arg4[%c0_19, %c0_20] : memref<4x128xf32, #tpu.memory_space<vmem>>, vector<4x128xf32>
    tpu.vector_store %arg4[%c0_19, %c0_20], %34 {strides = array<i32>} : memref<4x128xf32, #tpu.memory_space<vmem>>, vector<4x128xf32>,
    %cst_21 = arith.constant -1.687360e-01 : f32
    %36 = vector.broadcast %cst_21 : f32 to vector<4x128xf32>
    %37 = arith.mulf %36, %8 : vector<4x128xf32>
    %cst_22 = arith.constant 3.312640e-01 : f32
    %38 = vector.broadcast %cst_22 : f32 to vector<4x128xf32>
    %39 = arith.mulf %38, %17 : vector<4x128xf32>
    %40 = arith.subf %37, %39 : vector<4x128xf32>
    %cst_23 = arith.constant 5.000000e-01 : f32
    %41 = vector.broadcast %cst_23 : f32 to vector<4x128xf32>
    %42 = arith.mulf %41, %26 : vector<4x128xf32>
    %43 = arith.addf %40, %42 : vector<4x128xf32>
    %cst_24 = arith.constant 1.280000e+02 : f32
    %44 = vector.broadcast %cst_24 : f32 to vector<4x128xf32>
    %45 = arith.addf %43, %44 : vector<4x128xf32>
    %c0_25 = arith.constant 0 : index
    %c0_26 = arith.constant 0 : index
    %46 = vector.load %arg5[%c0_25, %c0_26] : memref<4x128xf32, #tpu.memory_space<vmem>>, vector<4x128xf32>
    tpu.vector_store %arg5[%c0_25, %c0_26], %45 {strides = array<i32>} : memref<4x128xf32, #tpu.memory_space<vmem>>, vector<4x128xf32>,
    %cst_27 = arith.constant 5.000000e-01 : f32
    %47 = vector.broadcast %cst_27 : f32 to vector<4x128xf32>
    %48 = arith.mulf %47, %8 : vector<4x128xf32>
    %cst_28 = arith.constant 4.186880e-01 : f32
    %49 = vector.broadcast %cst_28 : f32 to vector<4x128xf32>
    %50 = arith.mulf %49, %17 : vector<4x128xf32>
    %51 = arith.subf %48, %50 : vector<4x128xf32>
    %cst_29 = arith.constant 8.131200e-02 : f32
    %52 = vector.broadcast %cst_29 : f32 to vector<4x128xf32>
    %53 = arith.mulf %52, %26 : vector<4x128xf32>
    %54 = arith.subf %51, %53 : vector<4x128xf32>
    %cst_30 = arith.constant 1.280000e+02 : f32
    %55 = vector.broadcast %cst_30 : f32 to vector<4x128xf32>
    %56 = arith.addf %54, %55 : vector<4x128xf32>
    %c0_31 = arith.constant 0 : index
    %c0_32 = arith.constant 0 : index
    %57 = vector.load %arg6[%c0_31, %c0_32] : memref<4x128xf32, #tpu.memory_space<vmem>>, vector<4x128xf32>
    tpu.vector_store %arg6[%c0_31, %c0_32], %56 {strides = array<i32>} : memref<4x128xf32, #tpu.memory_space<vmem>>, vector<4x128xf32>,
    return
  }
  func.func @transform_0(%arg0: i32) -> (i32, i32) {
    %c0_i32 = arith.constant 0 : i32
    %c0_i32_0 = arith.constant 0 : i32
    return %arg0, %c0_i32 : i32, i32
  }
  func.func @transform_1(%arg0: i32) -> (i32, i32) {
    %c0_i32 = arith.constant 0 : i32
    %c0_i32_0 = arith.constant 0 : i32
    return %arg0, %c0_i32 : i32, i32
  }
  func.func @transform_2(%arg0: i32) -> (i32, i32) {
    %c0_i32 = arith.constant 0 : i32
    %c0_i32_0 = arith.constant 0 : i32
    return %arg0, %c0_i32 : i32, i32
  }
  func.func @transform_3(%arg0: i32) -> (i32, i32) {
    %c0_i32 = arith.constant 0 : i32
    %c0_i32_0 = arith.constant 0 : i32
    return %arg0, %c0_i32 : i32, i32
  }
  func.func @transform_4(%arg0: i32) -> (i32, i32) {
    %c0_i32 = arith.constant 0 : i32
    %c0_i32_0 = arith.constant 0 : i32
    return %arg0, %c0_i32 : i32, i32
  }
  func.func @transform_5(%arg0: i32) -> (i32, i32) {
    %c0_i32 = arith.constant 0 : i32
    %c0_i32_0 = arith.constant 0 : i32
    return %arg0, %c0_i32 : i32, i32
  }
}

module attributes {stable_mosaic.version = 11 : i64} {
  func.func @_jpeg_block_kernel(%arg0: i32, %arg1: memref<4x128xf32, #tpu.memory_space<vmem>>, %arg2: memref<128x128xf32, #tpu.memory_space<vmem>>, %arg3: memref<128x128xf32, #tpu.memory_space<vmem>>, %arg4: memref<4x128xf32, #tpu.memory_space<vmem>>) attributes {dimension_semantics = [#tpu.dimension_semantics<parallel>], iteration_bounds = array<i64: 1>, scalar_prefetch = 0 : i64, scratch_operands = 0 : i64, tpu.core_type = #tpu.core_type<tc>, window_params = [{transform_indices = @transform_0, window_bounds = array<i64: 4, 128>}, {pipeline_mode = #tpu.pipeline_mode<synchronous>, transform_indices = @transform_1, window_bounds = array<i64: 128, 128>}, {pipeline_mode = #tpu.pipeline_mode<synchronous>, transform_indices = @transform_2, window_bounds = array<i64: 128, 128>}, {transform_indices = @transform_3, window_bounds = array<i64: 4, 128>}]} {
    %c0 = arith.constant 0 : index
    %c0_0 = arith.constant 0 : index
    %0 = vector.load %arg1[%c0, %c0_0] : memref<4x128xf32, #tpu.memory_space<vmem>>, vector<4x128xf32>
    %cst = arith.constant 1.280000e+02 : f32
    %1 = vector.broadcast %cst : f32 to vector<4x128xf32>
    %2 = arith.subf %0, %1 : vector<4x128xf32>
    %c0_1 = arith.constant 0 : index
    %c0_2 = arith.constant 0 : index
    %3 = vector.load %arg2[%c0_1, %c0_2] : memref<128x128xf32, #tpu.memory_space<vmem>>, vector<128x128xf32>
    %cst_3 = arith.constant dense<0.000000e+00> : vector<4x128xf32>
    %4 = tpu.matmul %2, %3, %cst_3 {dimension_numbers = #tpu.dot_dimension_numbers<[1], [0], [0], [1], [0, 0, 1, 1], [], []>} : vector<4x128xf32>, vector<128x128xf32>, vector<4x128xf32> -> vector<4x128xf32>
    %5 = math.roundeven %4 : vector<4x128xf32>
    %6 = arith.subf %4, %5 : vector<4x128xf32>
    %7 = arith.mulf %6, %6 : vector<4x128xf32>
    %8 = arith.mulf %6, %7 : vector<4x128xf32>
    %9 = arith.addf %5, %8 : vector<4x128xf32>
    %c0_4 = arith.constant 0 : index
    %c0_5 = arith.constant 0 : index
    %10 = vector.load %arg3[%c0_4, %c0_5] : memref<128x128xf32, #tpu.memory_space<vmem>>, vector<128x128xf32>
    %cst_6 = arith.constant dense<0.000000e+00> : vector<4x128xf32>
    %11 = tpu.matmul %9, %10, %cst_6 {dimension_numbers = #tpu.dot_dimension_numbers<[1], [0], [0], [1], [0, 0, 1, 1], [], []>} : vector<4x128xf32>, vector<128x128xf32>, vector<4x128xf32> -> vector<4x128xf32>
    %cst_7 = arith.constant 1.280000e+02 : f32
    %12 = vector.broadcast %cst_7 : f32 to vector<4x128xf32>
    %13 = arith.addf %11, %12 : vector<4x128xf32>
    %c0_8 = arith.constant 0 : index
    %c0_9 = arith.constant 0 : index
    %14 = vector.load %arg4[%c0_8, %c0_9] : memref<4x128xf32, #tpu.memory_space<vmem>>, vector<4x128xf32>
    tpu.vector_store %arg4[%c0_8, %c0_9], %13 {strides = array<i32>} : memref<4x128xf32, #tpu.memory_space<vmem>>, vector<4x128xf32>,
    return
  }
  func.func @transform_0(%arg0: i32) -> (i32, i32) {
    %c0_i32 = arith.constant 0 : i32
    %c0_i32_0 = arith.constant 0 : i32
    return %arg0, %c0_i32 : i32, i32
  }
  func.func @transform_1(%arg0: i32) -> (i32, i32) {
    %c0_i32 = arith.constant 0 : i32
    %c0_i32_0 = arith.constant 0 : i32
    %c0_i32_1 = arith.constant 0 : i32
    return %c0_i32, %c0_i32_0 : i32, i32
  }
  func.func @transform_2(%arg0: i32) -> (i32, i32) {
    %c0_i32 = arith.constant 0 : i32
    %c0_i32_0 = arith.constant 0 : i32
    %c0_i32_1 = arith.constant 0 : i32
    return %c0_i32, %c0_i32_0 : i32, i32
  }
  func.func @transform_3(%arg0: i32) -> (i32, i32) {
    %c0_i32 = arith.constant 0 : i32
    %c0_i32_0 = arith.constant 0 : i32
    return %arg0, %c0_i32 : i32, i32
  }
}

module attributes {stable_mosaic.version = 11 : i64} {
  func.func @_jpeg_block_kernel(%arg0: i32, %arg1: memref<2x128xf32, #tpu.memory_space<vmem>>, %arg2: memref<128x128xf32, #tpu.memory_space<vmem>>, %arg3: memref<128x128xf32, #tpu.memory_space<vmem>>, %arg4: memref<2x128xf32, #tpu.memory_space<vmem>>) attributes {dimension_semantics = [#tpu.dimension_semantics<parallel>], iteration_bounds = array<i64: 1>, scalar_prefetch = 0 : i64, scratch_operands = 0 : i64, tpu.core_type = #tpu.core_type<tc>, window_params = [{transform_indices = @transform_0, window_bounds = array<i64: 2, 128>}, {pipeline_mode = #tpu.pipeline_mode<synchronous>, transform_indices = @transform_1, window_bounds = array<i64: 128, 128>}, {pipeline_mode = #tpu.pipeline_mode<synchronous>, transform_indices = @transform_2, window_bounds = array<i64: 128, 128>}, {transform_indices = @transform_3, window_bounds = array<i64: 2, 128>}]} {
    %c0 = arith.constant 0 : index
    %c0_0 = arith.constant 0 : index
    %0 = vector.load %arg1[%c0, %c0_0] : memref<2x128xf32, #tpu.memory_space<vmem>>, vector<2x128xf32>
    %cst = arith.constant 1.280000e+02 : f32
    %1 = vector.broadcast %cst : f32 to vector<2x128xf32>
    %2 = arith.subf %0, %1 : vector<2x128xf32>
    %c0_1 = arith.constant 0 : index
    %c0_2 = arith.constant 0 : index
    %3 = vector.load %arg2[%c0_1, %c0_2] : memref<128x128xf32, #tpu.memory_space<vmem>>, vector<128x128xf32>
    %cst_3 = arith.constant dense<0.000000e+00> : vector<2x128xf32>
    %4 = tpu.matmul %2, %3, %cst_3 {dimension_numbers = #tpu.dot_dimension_numbers<[1], [0], [0], [1], [0, 0, 1, 1], [], []>} : vector<2x128xf32>, vector<128x128xf32>, vector<2x128xf32> -> vector<2x128xf32>
    %5 = math.roundeven %4 : vector<2x128xf32>
    %6 = arith.subf %4, %5 : vector<2x128xf32>
    %7 = arith.mulf %6, %6 : vector<2x128xf32>
    %8 = arith.mulf %6, %7 : vector<2x128xf32>
    %9 = arith.addf %5, %8 : vector<2x128xf32>
    %c0_4 = arith.constant 0 : index
    %c0_5 = arith.constant 0 : index
    %10 = vector.load %arg3[%c0_4, %c0_5] : memref<128x128xf32, #tpu.memory_space<vmem>>, vector<128x128xf32>
    %cst_6 = arith.constant dense<0.000000e+00> : vector<2x128xf32>
    %11 = tpu.matmul %9, %10, %cst_6 {dimension_numbers = #tpu.dot_dimension_numbers<[1], [0], [0], [1], [0, 0, 1, 1], [], []>} : vector<2x128xf32>, vector<128x128xf32>, vector<2x128xf32> -> vector<2x128xf32>
    %cst_7 = arith.constant 1.280000e+02 : f32
    %12 = vector.broadcast %cst_7 : f32 to vector<2x128xf32>
    %13 = arith.addf %11, %12 : vector<2x128xf32>
    %c0_8 = arith.constant 0 : index
    %c0_9 = arith.constant 0 : index
    %14 = vector.load %arg4[%c0_8, %c0_9] : memref<2x128xf32, #tpu.memory_space<vmem>>, vector<2x128xf32>
    tpu.vector_store %arg4[%c0_8, %c0_9], %13 {strides = array<i32>} : memref<2x128xf32, #tpu.memory_space<vmem>>, vector<2x128xf32>,
    return
  }
  func.func @transform_0(%arg0: i32) -> (i32, i32) {
    %c0_i32 = arith.constant 0 : i32
    %c0_i32_0 = arith.constant 0 : i32
    return %arg0, %c0_i32 : i32, i32
  }
  func.func @transform_1(%arg0: i32) -> (i32, i32) {
    %c0_i32 = arith.constant 0 : i32
    %c0_i32_0 = arith.constant 0 : i32
    %c0_i32_1 = arith.constant 0 : i32
    return %c0_i32, %c0_i32_0 : i32, i32
  }
  func.func @transform_2(%arg0: i32) -> (i32, i32) {
    %c0_i32 = arith.constant 0 : i32
    %c0_i32_0 = arith.constant 0 : i32
    %c0_i32_1 = arith.constant 0 : i32
    return %c0_i32, %c0_i32_0 : i32, i32
  }
  func.func @transform_3(%arg0: i32) -> (i32, i32) {
    %c0_i32 = arith.constant 0 : i32
    %c0_i32_0 = arith.constant 0 : i32
    return %arg0, %c0_i32 : i32, i32
  }
}

module attributes {stable_mosaic.version = 11 : i64} {
  func.func @_ycc_to_rgb_kernel(%arg0: i32, %arg1: memref<4x128xf32, #tpu.memory_space<vmem>>, %arg2: memref<4x128xf32, #tpu.memory_space<vmem>>, %arg3: memref<4x128xf32, #tpu.memory_space<vmem>>, %arg4: memref<4x128xf32, #tpu.memory_space<vmem>>, %arg5: memref<4x128xf32, #tpu.memory_space<vmem>>, %arg6: memref<4x128xf32, #tpu.memory_space<vmem>>) attributes {dimension_semantics = [#tpu.dimension_semantics<parallel>], iteration_bounds = array<i64: 1>, scalar_prefetch = 0 : i64, scratch_operands = 0 : i64, tpu.core_type = #tpu.core_type<tc>, window_params = [{transform_indices = @transform_0, window_bounds = array<i64: 4, 128>}, {transform_indices = @transform_1, window_bounds = array<i64: 4, 128>}, {transform_indices = @transform_2, window_bounds = array<i64: 4, 128>}, {transform_indices = @transform_3, window_bounds = array<i64: 4, 128>}, {transform_indices = @transform_4, window_bounds = array<i64: 4, 128>}, {transform_indices = @transform_5, window_bounds = array<i64: 4, 128>}]} {
    %c0 = arith.constant 0 : index
    %c0_0 = arith.constant 0 : index
    %0 = vector.load %arg1[%c0, %c0_0] : memref<4x128xf32, #tpu.memory_space<vmem>>, vector<4x128xf32>
    %c0_1 = arith.constant 0 : index
    %c0_2 = arith.constant 0 : index
    %1 = vector.load %arg2[%c0_1, %c0_2] : memref<4x128xf32, #tpu.memory_space<vmem>>, vector<4x128xf32>
    %cst = arith.constant 1.280000e+02 : f32
    %2 = vector.broadcast %cst : f32 to vector<4x128xf32>
    %3 = arith.subf %1, %2 : vector<4x128xf32>
    %c0_3 = arith.constant 0 : index
    %c0_4 = arith.constant 0 : index
    %4 = vector.load %arg3[%c0_3, %c0_4] : memref<4x128xf32, #tpu.memory_space<vmem>>, vector<4x128xf32>
    %cst_5 = arith.constant 1.280000e+02 : f32
    %5 = vector.broadcast %cst_5 : f32 to vector<4x128xf32>
    %6 = arith.subf %4, %5 : vector<4x128xf32>
    %cst_6 = arith.constant 1.402000e+00 : f32
    %7 = vector.broadcast %cst_6 : f32 to vector<4x128xf32>
    %8 = arith.mulf %7, %6 : vector<4x128xf32>
    %9 = arith.addf %0, %8 : vector<4x128xf32>
    %cst_7 = arith.constant 3.441360e-01 : f32
    %10 = vector.broadcast %cst_7 : f32 to vector<4x128xf32>
    %11 = arith.mulf %10, %3 : vector<4x128xf32>
    %12 = arith.subf %0, %11 : vector<4x128xf32>
    %cst_8 = arith.constant 7.141360e-01 : f32
    %13 = vector.broadcast %cst_8 : f32 to vector<4x128xf32>
    %14 = arith.mulf %13, %6 : vector<4x128xf32>
    %15 = arith.subf %12, %14 : vector<4x128xf32>
    %cst_9 = arith.constant 1.772000e+00 : f32
    %16 = vector.broadcast %cst_9 : f32 to vector<4x128xf32>
    %17 = arith.mulf %16, %3 : vector<4x128xf32>
    %18 = arith.addf %0, %17 : vector<4x128xf32>
    %cst_10 = arith.constant 0.000000e+00 : f32
    %cst_11 = arith.constant 2.550000e+02 : f32
    %19 = vector.broadcast %cst_10 : f32 to vector<4x128xf32>
    %20 = arith.maximumf %19, %9 : vector<4x128xf32>
    %21 = vector.broadcast %cst_11 : f32 to vector<4x128xf32>
    %22 = arith.minimumf %21, %20 : vector<4x128xf32>
    %cst_12 = arith.constant 0.00784313772 : f32
    %23 = vector.broadcast %cst_12 : f32 to vector<4x128xf32>
    %24 = arith.mulf %22, %23 : vector<4x128xf32>
    %cst_13 = arith.constant 1.000000e+00 : f32
    %25 = vector.broadcast %cst_13 : f32 to vector<4x128xf32>
    %26 = arith.subf %24, %25 : vector<4x128xf32>
    %c0_14 = arith.constant 0 : index
    %c0_15 = arith.constant 0 : index
    %27 = vector.load %arg4[%c0_14, %c0_15] : memref<4x128xf32, #tpu.memory_space<vmem>>, vector<4x128xf32>
    tpu.vector_store %arg4[%c0_14, %c0_15], %26 {strides = array<i32>} : memref<4x128xf32, #tpu.memory_space<vmem>>, vector<4x128xf32>,
    %cst_16 = arith.constant 0.000000e+00 : f32
    %cst_17 = arith.constant 2.550000e+02 : f32
    %28 = vector.broadcast %cst_16 : f32 to vector<4x128xf32>
    %29 = arith.maximumf %28, %15 : vector<4x128xf32>
    %30 = vector.broadcast %cst_17 : f32 to vector<4x128xf32>
    %31 = arith.minimumf %30, %29 : vector<4x128xf32>
    %cst_18 = arith.constant 0.00784313772 : f32
    %32 = vector.broadcast %cst_18 : f32 to vector<4x128xf32>
    %33 = arith.mulf %31, %32 : vector<4x128xf32>
    %cst_19 = arith.constant 1.000000e+00 : f32
    %34 = vector.broadcast %cst_19 : f32 to vector<4x128xf32>
    %35 = arith.subf %33, %34 : vector<4x128xf32>
    %c0_20 = arith.constant 0 : index
    %c0_21 = arith.constant 0 : index
    %36 = vector.load %arg5[%c0_20, %c0_21] : memref<4x128xf32, #tpu.memory_space<vmem>>, vector<4x128xf32>
    tpu.vector_store %arg5[%c0_20, %c0_21], %35 {strides = array<i32>} : memref<4x128xf32, #tpu.memory_space<vmem>>, vector<4x128xf32>,
    %cst_22 = arith.constant 0.000000e+00 : f32
    %cst_23 = arith.constant 2.550000e+02 : f32
    %37 = vector.broadcast %cst_22 : f32 to vector<4x128xf32>
    %38 = arith.maximumf %37, %18 : vector<4x128xf32>
    %39 = vector.broadcast %cst_23 : f32 to vector<4x128xf32>
    %40 = arith.minimumf %39, %38 : vector<4x128xf32>
    %cst_24 = arith.constant 0.00784313772 : f32
    %41 = vector.broadcast %cst_24 : f32 to vector<4x128xf32>
    %42 = arith.mulf %40, %41 : vector<4x128xf32>
    %cst_25 = arith.constant 1.000000e+00 : f32
    %43 = vector.broadcast %cst_25 : f32 to vector<4x128xf32>
    %44 = arith.subf %42, %43 : vector<4x128xf32>
    %c0_26 = arith.constant 0 : index
    %c0_27 = arith.constant 0 : index
    %45 = vector.load %arg6[%c0_26, %c0_27] : memref<4x128xf32, #tpu.memory_space<vmem>>, vector<4x128xf32>
    tpu.vector_store %arg6[%c0_26, %c0_27], %44 {strides = array<i32>} : memref<4x128xf32, #tpu.memory_space<vmem>>, vector<4x128xf32>,
    return
  }
  func.func @transform_0(%arg0: i32) -> (i32, i32) {
    %c0_i32 = arith.constant 0 : i32
    %c0_i32_0 = arith.constant 0 : i32
    return %arg0, %c0_i32 : i32, i32
  }
  func.func @transform_1(%arg0: i32) -> (i32, i32) {
    %c0_i32 = arith.constant 0 : i32
    %c0_i32_0 = arith.constant 0 : i32
    return %arg0, %c0_i32 : i32, i32
  }
  func.func @transform_2(%arg0: i32) -> (i32, i32) {
    %c0_i32 = arith.constant 0 : i32
    %c0_i32_0 = arith.constant 0 : i32
    return %arg0, %c0_i32 : i32, i32
  }
  func.func @transform_3(%arg0: i32) -> (i32, i32) {
    %c0_i32 = arith.constant 0 : i32
    %c0_i32_0 = arith.constant 0 : i32
    return %arg0, %c0_i32 : i32, i32
  }
  func.func @transform_4(%arg0: i32) -> (i32, i32) {
    %c0_i32 = arith.constant 0 : i32
    %c0_i32_0 = arith.constant 0 : i32
    return %arg0, %c0_i32 : i32, i32
  }
  func.func @transform_5(%arg0: i32) -> (i32, i32) {
    %c0_i32 = arith.constant 0 : i32
    %c0_i32_0 = arith.constant 0 : i32
    return %arg0, %c0_i32 : i32, i32
  }
}

</mosaic_0001>

<llo_original>
// kernel: squeeze.3
$region0: #{squeeze.3}
  %s0 = inlined_call_operand.vmem [shape: f32[2,1,16,16], index: 0, kind: input, shape index: {}]
  %s1 = inlined_call_operand.vmem [shape: f32[4,128], index: 1, kind: output, shape index: {}]
  $region1: #{squeeze.3} parent=0
    #allocation0 [shape = 'u8[4096]{0}', space=vmem, size = 0x1000, scoped, tag = 'scoped mem for output reshape']
    %v2 = vld [vmem:[%s0] ss:$8 sm:$0xf]
    %vm3 = vcmask 130048
    %4 = vst.msk [vmem:[#allocation0] sm:$0xf] %vm3, %v2
    %s5 = scalar_lea.vmem %s0, 7
    %v6 = vld [vmem:[%s5] ss:$8 sm:$0xf]
    %7 = vrot.lane.b32.xlu0 %v6, 112
    %v8 = vpop.permute.xlu0 %7
    %vm9 = vcmask 1048448
    %10 = vst.msk [vmem:[#allocation0] sm:$0xf] %vm9, %v8
    %s11 = scalar_lea.vmem %s0, 6
    %v12 = vld [vmem:[%s11] ss:$8 sm:$0xf]
    %13 = vrot.lane.b32.xlu0 %v12, 96
    %v14 = vpop.permute.xlu0 %13
    %vm15 = vcmask 917248
    %16 = vst.msk [vmem:[#allocation0] sm:$0xf] %vm15, %v14
    %s17 = scalar_lea.vmem %s0, 5
    %v18 = vld [vmem:[%s17] ss:$8 sm:$0xf]
    %19 = vrot.lane.b32.xlu0 %v18, 80
    %v20 = vpop.permute.xlu0 %19
    %vm21 = vcmask 786048
    %22 = vst.msk [vmem:[#allocation0] sm:$0xf] %vm21, %v20
    %s23 = scalar_lea.vmem %s0, 4
    %v24 = vld [vmem:[%s23] ss:$8 sm:$0xf]
    %25 = vrot.lane.b32.xlu0 %v24, 64
    %v26 = vpop.permute.xlu0 %25
    %vm27 = vcmask 654848
    %28 = vst.msk [vmem:[#allocation0] sm:$0xf] %vm27, %v26
    %s29 = scalar_lea.vmem %s0, 3
    %v30 = vld [vmem:[%s29] ss:$8 sm:$0xf]
    %31 = vrot.lane.b32.xlu0 %v30, 48
    %v32 = vpop.permute.xlu0 %31
    %vm33 = vcmask 523648
    %34 = vst.msk [vmem:[#allocation0] sm:$0xf] %vm33, %v32
    %s35 = scalar_lea.vmem %s0, 2
    %v36 = vld [vmem:[%s35] ss:$8 sm:$0xf]
    %37 = vrot.lane.b32.xlu0 %v36, 32
    %v38 = vpop.permute.xlu0 %37
    %vm39 = vcmask 392448
    %40 = vst.msk [vmem:[#allocation0] sm:$0xf] %vm39, %v38
    %s41 = scalar_lea.vmem %s0, 1
    %v42 = vld [vmem:[%s41] ss:$8 sm:$0xf]
    %43 = vrot.lane.b32.xlu0 %v42, 16
    %v44 = vpop.permute.xlu0 %43
    %vm45 = vcmask 261248
    %46 = vst.msk [vmem:[#allocation0] sm:$0xf] %vm45, %v44
    %s48 = sshll.u32 1, 4
    %s49 = ssub.s32 %s48, 1
    %v51 = vld [vmem:[#allocation0] sm:%s49]
    %s52 = sshll.u32 1, 4
    %s53 = ssub.s32 %s52, 1
    %54 = vst [vmem:[%s1] sm:%s53] %v51

// kernel: jpeg_diff_forward.4
$region0: #{jpeg_diff_forward.4}
  #allocation0 [shape = 'u32[]', space=smem, size = 0x4, offset = 0x4, fixed_abs, tag = 'smem constant byte address 0x4 - core index']
  #allocation1 [shape = 'u32[144,128]{1,0:T(1,128)}', space=vmem, size = 0x12000, scoped, tag = 'internal scratch']
  %s0 = inlined_call_operand.vmem [shape: f32[4,128], index: 0, kind: input, shape index: {}, may-alias: {0,3}]
  %s1 = inlined_call_operand.vmem [shape: f32[4,128], index: 1, kind: input, shape index: {}, may-alias: {1,4}]
  %s2 = inlined_call_operand.vmem [shape: f32[4,128], index: 2, kind: input, shape index: {}, may-alias: {2,5}]
  %s3 = inlined_call_operand.vmem [shape: f32[4,128], index: 3, kind: output, shape index: {0}, may-alias: {0,3}]
  %s4 = inlined_call_operand.vmem [shape: f32[4,128], index: 4, kind: output, shape index: {1}, may-alias: {1,4}]
  %s5 = inlined_call_operand.vmem [shape: f32[4,128], index: 5, kind: output, shape index: {2}, may-alias: {2,5}]
  %6 = xla_tuple %s3, %s4, %s5
  %s7 = sld [smem:[#allocation0]]
  $region38: #{jpeg_diff_forward.4} parent=0
    _
  %s9 = ssub.s32 1, %s7
  %s10 = scalar_select 0, %s9, %s7
  // Predicated region
  $region2: #{jpeg_diff_forward.4} parent=0 // pred_check
    _
  $region3: #{jpeg_diff_forward.4} parent=0 // pred_check_branch
    %12 = sbr.rel (0) target = $region5
  $region4: #{jpeg_diff_forward.4} parent=0 // pred_region
    _
  $region5: #{jpeg_diff_forward.4} parent=0 // pred_fallthru
    _
  // Predicated region
  $region6: #{jpeg_diff_forward.4} parent=0 // pred_check
    _
  $region7: #{jpeg_diff_forward.4} parent=0 // pred_check_branch
    %14 = sbr.rel (0) target = $region9
  $region8: #{jpeg_diff_forward.4} parent=0 // pred_region
    _
  $region9: #{jpeg_diff_forward.4} parent=0 // pred_fallthru
    _
  // Predicated region
  $region10: #{jpeg_diff_forward.4} parent=0 // pred_check
    _
  $region11: #{jpeg_diff_forward.4} parent=0 // pred_check_branch
    %16 = sbr.rel (0) target = $region13
  $region12: #{jpeg_diff_forward.4} parent=0 // pred_region
    _
  $region13: #{jpeg_diff_forward.4} parent=0 // pred_fallthru
    _
  %v17 = vld [vmem:[%s0] sm:$0xf]
  %v18 = vmax.f32 %v17, -1.0
  %v19 = vmin.f32 %v18, 1.0
  %v20 = vadd.f32 %v19, 1.0
  %v21 = vmul.f32 %v20, 127.5
  %v22 = vld [vmem:[%s1] sm:$0xf]
  %v23 = vmax.f32 %v22, -1.0
  %v24 = vmin.f32 %v23, 1.0
  %v25 = vadd.f32 %v24, 1.0
  %v26 = vmul.f32 %v25, 127.5
  %v27 = vld [vmem:[%s2] sm:$0xf]
  %v28 = vmax.f32 %v27, -1.0
  %v29 = vmin.f32 %v28, 1.0
  %v30 = vadd.f32 %v29, 1.0
  %v31 = vmul.f32 %v30, 127.5
  %v32 = vmul.f32 %v21, 0.299
  %v33 = vmul.f32 %v26, 0.587
  %v34 = vadd.f32 %v32, %v33
  %v35 = vmul.f32 %v31, 0.114
  %v36 = vadd.f32 %v34, %v35
  %37 = vst [vmem:[%s3] sm:$0xf] %v36
  %v38 = vmul.f32 %v21, -0.168736
  %v39 = vmul.f32 %v26, 0.331264
  %v40 = vsub.f32 %v38, %v39
  %v41 = vmul.f32 %v31, 0.5
  %v42 = vadd.f32 %v40, %v41
  %v43 = vadd.f32 %v42, 128.0
  %44 = vst [vmem:[%s4] sm:$0xf] %v43
  %v45 = vmul.f32 %v21, 0.5
  %v46 = vmul.f32 %v26, 0.418688
  %v47 = vsub.f32 %v45, %v46
  %v48 = vmul.f32 %v31, 0.081312
  %v49 = vsub.f32 %v47, %v48
  %v50 = vadd.f32 %v49, 128.0
  %51 = vst [vmem:[%s5] sm:$0xf] %v50
  // Predicated region
  $region14: #{jpeg_diff_forward.4} parent=0 // pred_check
    _
  $region15: #{jpeg_diff_forward.4} parent=0 // pred_check_branch
    %53 = sbr.rel (0) target = $region17
  $region16: #{jpeg_diff_forward.4} parent=0 // pred_region
    _
  $region17: #{jpeg_diff_forward.4} parent=0 // pred_fallthru
    _
  // Predicated region
  $region18: #{jpeg_diff_forward.4} parent=0 // pred_check
    _
  $region19: #{jpeg_diff_forward.4} parent=0 // pred_check_branch
    %55 = sbr.rel (0) target = $region21
  $region20: #{jpeg_diff_forward.4} parent=0 // pred_region
    _
  $region21: #{jpeg_diff_forward.4} parent=0 // pred_fallthru
    _
  // Predicated region
  $region22: #{jpeg_diff_forward.4} parent=0 // pred_check
    _
  $region23: #{jpeg_diff_forward.4} parent=0 // pred_check_branch
    %57 = sbr.rel (0) target = $region25
  $region24: #{jpeg_diff_forward.4} parent=0 // pred_region
    _
  $region25: #{jpeg_diff_forward.4} parent=0 // pred_fallthru
    _
  // Predicated region
  $region26: #{jpeg_diff_forward.4} parent=0 // pred_check
    _
  $region27: #{jpeg_diff_forward.4} parent=0 // pred_check_branch
    %59 = sbr.rel (0) target = $region29
  $region28: #{jpeg_diff_forward.4} parent=0 // pred_region
    _
  $region29: #{jpeg_diff_forward.4} parent=0 // pred_fallthru
    _
  // Predicated region
  $region30: #{jpeg_diff_forward.4} parent=0 // pred_check
    _
  $region31: #{jpeg_diff_forward.4} parent=0 // pred_check_branch
    %61 = sbr.rel (0) target = $region33
  $region32: #{jpeg_diff_forward.4} parent=0 // pred_region
    _
  $region33: #{jpeg_diff_forward.4} parent=0 // pred_fallthru
    _
  // Predicated region
  $region34: #{jpeg_diff_forward.4} parent=0 // pred_check
    _
  $region35: #{jpeg_diff_forward.4} parent=0 // pred_check_branch
    %63 = sbr.rel (0) target = $region37
  $region36: #{jpeg_diff_forward.4} parent=0 // pred_region
    _
  $region37: #{jpeg_diff_forward.4} parent=0 // pred_fallthru
    _

// kernel: jpeg_diff_forward.5
$region0: #{jpeg_diff_forward.5}
  #allocation0 [shape = 'u32[]', space=smem, size = 0x4, offset = 0x4, fixed_abs, tag = 'smem constant byte address 0x4 - core index']
  #allocation1 [shape = 'u32[144,128]{1,0:T(1,128)}', space=vmem, size = 0x12000, scoped, tag = 'internal scratch']
  %s0 = inlined_call_operand.vmem [shape: f32[4,128], index: 0, kind: input, shape index: {}, may-alias: {0,3}]
  %s1 = inlined_call_operand.vmem [shape: f32[128,128], index: 1, kind: input, shape index: {}]
  %s2 = inlined_call_operand.vmem [shape: f32[128,128], index: 2, kind: input, shape index: {}]
  %s3 = inlined_call_operand.vmem [shape: f32[4,128], index: 3, kind: output, shape index: {}, may-alias: {0,3}]
  %s4 = sld [smem:[#allocation0]]
  $region22: #{jpeg_diff_forward.5} parent=0
    _
  %s6 = ssub.s32 1, %s4
  %s7 = scalar_select 0, %s6, %s4
  // Predicated region
  $region2: #{jpeg_diff_forward.5} parent=0 // pred_check
    _
  $region3: #{jpeg_diff_forward.5} parent=0 // pred_check_branch
    %9 = sbr.rel (0) target = $region5
  $region4: #{jpeg_diff_forward.5} parent=0 // pred_region
    _
  $region5: #{jpeg_diff_forward.5} parent=0 // pred_fallthru
    _
  // Predicated region
  $region6: #{jpeg_diff_forward.5} parent=0 // pred_check
    _
  $region7: #{jpeg_diff_forward.5} parent=0 // pred_check_branch
    %11 = sbr.rel (0) target = $region9
  $region8: #{jpeg_diff_forward.5} parent=0 // pred_region
    _
  $region9: #{jpeg_diff_forward.5} parent=0 // pred_fallthru
    _
  // Predicated region
  $region10: #{jpeg_diff_forward.5} parent=0 // pred_check
    _
  $region11: #{jpeg_diff_forward.5} parent=0 // pred_check_branch
    %13 = sbr.rel (0) target = $region13
  $region12: #{jpeg_diff_forward.5} parent=0 // pred_region
    _
  $region13: #{jpeg_diff_forward.5} parent=0 // pred_fallthru
    _
  %v14 = vld [vmem:[%s0] sm:$0xf]
  %v15 = vsub.f32 %v14, 128.0
  %v16 = vld [vmem:[%s1] sm:$0xff]
  %v17 = vld [vmem:[%s1 + $0x8] sm:$0xff]
  %v18 = vld [vmem:[%s1 + $0x10] sm:$0xff]
  %v19 = vld [vmem:[%s1 + $0x18] sm:$0xff]
  %v20 = vld [vmem:[%s1 + $0x20] sm:$0xff]
  %v21 = vld [vmem:[%s1 + $0x28] sm:$0xff]
  %v22 = vld [vmem:[%s1 + $0x30] sm:$0xff]
  %v23 = vld [vmem:[%s1 + $0x38] sm:$0xff]
  %v24 = vld [vmem:[%s1 + $0x40] sm:$0xff]
  %v25 = vld [vmem:[%s1 + $0x48] sm:$0xff]
  %v26 = vld [vmem:[%s1 + $0x50] sm:$0xff]
  %v27 = vld [vmem:[%s1 + $0x58] sm:$0xff]
  %v28 = vld [vmem:[%s1 + $0x60] sm:$0xff]
  %v29 = vld [vmem:[%s1 + $0x68] sm:$0xff]
  %v30 = vld [vmem:[%s1 + $0x70] sm:$0xff]
  %v31 = vld [vmem:[%s1 + $0x78] sm:$0xff]
  %32 = vmatprep.subr.mxu0 0.0
  %33 = vmatpush1.msra.mxu0 %v31
  %34 = vmatprep.subr.mxu0 0.0
  %35 = vmatpush1.msra.mxu0 %v30
  %36 = vmatprep.subr.mxu0 0.0
  %37 = vmatpush1.msra.mxu0 %v29
  %38 = vmatprep.subr.mxu0 0.0
  %39 = vmatpush1.msra.mxu0 %v28
  %40 = vmatprep.subr.mxu0 0.0
  %41 = vmatpush1.msra.mxu0 %v27
  %42 = vmatprep.subr.mxu0 0.0
  %43 = vmatpush1.msra.mxu0 %v26
  %44 = vmatprep.subr.mxu0 0.0
  %45 = vmatpush1.msra.mxu0 %v25
  %46 = vmatprep.subr.mxu0 0.0
  %47 = vmatpush1.msra.mxu0 %v24
  %48 = vmatprep.subr.mxu0 0.0
  %49 = vmatpush1.msra.mxu0 %v23
  %50 = vmatprep.subr.mxu0 0.0
  %51 = vmatpush1.msra.mxu0 %v22
  %52 = vmatprep.subr.mxu0 0.0
  %53 = vmatpush1.msra.mxu0 %v21
  %54 = vmatprep.subr.mxu0 0.0
  %55 = vmatpush1.msra.mxu0 %v20
  %56 = vmatprep.subr.mxu0 0.0
  %57 = vmatpush1.msra.mxu0 %v19
  %58 = vmatprep.subr.mxu0 0.0
  %59 = vmatpush1.msra.mxu0 %v18
  %60 = vmatprep.subr.mxu0 0.0
  %61 = vmatpush1.msra.mxu0 %v17
  %62 = vmatprep.subr.mxu0 0.0
  %63 = vmatpush1.msra.mxu0 %v16
  %64 = vmatprep.subr.mxu0 0.0
  %65 = vmatpush2.msra.mxu0 0.0
  %66 = vmatprep.subr.mxu0 0.0
  %67 = vmatpush2.msra.mxu0 0.0
  %68 = vmatprep.subr.mxu0 0.0
  %69 = vmatpush2.msra.mxu0 0.0
  %70 = vmatprep.subr.mxu0 0.0
  %71 = vmatpush2.msra.mxu0 0.0
  %72 = vmatprep.subr.mxu0 0.0
  %73 = vmatpush2.msra.mxu0 0.0
  %74 = vmatprep.subr.mxu0 0.0
  %75 = vmatpush2.msra.mxu0 0.0
  %76 = vmatprep.subr.mxu0 0.0
  %77 = vmatpush2.msra.mxu0 0.0
  %78 = vmatprep.subr.mxu0 0.0
  %79 = vmatpush2.msra.mxu0 0.0
  %80 = vmatprep.subr.mxu0 0.0
  %81 = vmatpush2.msra.mxu0 0.0
  %82 = vmatprep.subr.mxu0 0.0
  %83 = vmatpush2.msra.mxu0 0.0
  %84 = vmatprep.subr.mxu0 0.0
  %85 = vmatpush2.msra.mxu0 0.0
  %86 = vmatprep.subr.mxu0 0.0
  %87 = vmatpush2.msra.mxu0 0.0
  %88 = vmatprep.subr.mxu0 0.0
  %89 = vmatpush2.msra.mxu0 0.0
  %90 = vmatprep.subr.mxu0 0.0
  %91 = vmatpush2.msra.mxu0 0.0
  %92 = vmatprep.subr.mxu0 0.0
  %93 = vmatpush2.msra.mxu0 0.0
  %94 = vmatprep.subr.mxu0 0.0
  %95 = vmatpush2.msra.mxu0 0.0
  %96 = vmatprep.mubr.f32.mxu0 0.0
  %97 = vmatmul.mubr.f32.gmra.mxu0 %v15
  %v98 = vpop.f32.mrf.mxu0
  %v99 = vadd.f32 0.0, %v98
  %v100 = vpop.f32.mrf.mxu0
  %101 = vdwg.mxu0
  %v102 = vround.ne.pseudo %v99
  %v103 = vsub.f32 %v99, %v102
  %v104 = vmul.f32 %v103, %v103
  %v105 = vmul.f32 %v103, %v104
  %v106 = vadd.f32 %v102, %v105
  %v107 = vld [vmem:[%s2] sm:$0xff]
  %v108 = vld [vmem:[%s2 + $0x8] sm:$0xff]
  %v109 = vld [vmem:[%s2 + $0x10] sm:$0xff]
  %v110 = vld [vmem:[%s2 + $0x18] sm:$0xff]
  %v111 = vld [vmem:[%s2 + $0x20] sm:$0xff]
  %v112 = vld [vmem:[%s2 + $0x28] sm:$0xff]
  %v113 = vld [vmem:[%s2 + $0x30] sm:$0xff]
  %v114 = vld [vmem:[%s2 + $0x38] sm:$0xff]
  %v115 = vld [vmem:[%s2 + $0x40] sm:$0xff]
  %v116 = vld [vmem:[%s2 + $0x48] sm:$0xff]
  %v117 = vld [vmem:[%s2 + $0x50] sm:$0xff]
  %v118 = vld [vmem:[%s2 + $0x58] sm:$0xff]
  %v119 = vld [vmem:[%s2 + $0x60] sm:$0xff]
  %v120 = vld [vmem:[%s2 + $0x68] sm:$0xff]
  %v121 = vld [vmem:[%s2 + $0x70] sm:$0xff]
  %v122 = vld [vmem:[%s2 + $0x78] sm:$0xff]
  %123 = vmatprep.subr.mxu0 0.0
  %124 = vmatpush1.msra.mxu0 %v122
  %125 = vmatprep.subr.mxu0 0.0
  %126 = vmatpush1.msra.mxu0 %v121
  %127 = vmatprep.subr.mxu0 0.0
  %128 = vmatpush1.msra.mxu0 %v120
  %129 = vmatprep.subr.mxu0 0.0
  %130 = vmatpush1.msra.mxu0 %v119
  %131 = vmatprep.subr.mxu0 0.0
  %132 = vmatpush1.msra.mxu0 %v118
  %133 = vmatprep.subr.mxu0 0.0
  %134 = vmatpush1.msra.mxu0 %v117
  %135 = vmatprep.subr.mxu0 0.0
  %136 = vmatpush1.msra.mxu0 %v116
  %137 = vmatprep.subr.mxu0 0.0
  %138 = vmatpush1.msra.mxu0 %v115
  %139 = vmatprep.subr.mxu0 0.0
  %140 = vmatpush1.msra.mxu0 %v114
  %141 = vmatprep.subr.mxu0 0.0
  %142 = vmatpush1.msra.mxu0 %v113
  %143 = vmatprep.subr.mxu0 0.0
  %144 = vmatpush1.msra.mxu0 %v112
  %145 = vmatprep.subr.mxu0 0.0
  %146 = vmatpush1.msra.mxu0 %v111
  %147 = vmatprep.subr.mxu0 0.0
  %148 = vmatpush1.msra.mxu0 %v110
  %149 = vmatprep.subr.mxu0 0.0
  %150 = vmatpush1.msra.mxu0 %v109
  %151 = vmatprep.subr.mxu0 0.0
  %152 = vmatpush1.msra.mxu0 %v108
  %153 = vmatprep.subr.mxu0 0.0
  %154 = vmatpush1.msra.mxu0 %v107
  %155 = vmatprep.subr.mxu0 0.0
  %156 = vmatpush2.msra.mxu0 0.0
  %157 = vmatprep.subr.mxu0 0.0
  %158 = vmatpush2.msra.mxu0 0.0
  %159 = vmatprep.subr.mxu0 0.0
  %160 = vmatpush2.msra.mxu0 0.0
  %161 = vmatprep.subr.mxu0 0.0
  %162 = vmatpush2.msra.mxu0 0.0
  %163 = vmatprep.subr.mxu0 0.0
  %164 = vmatpush2.msra.mxu0 0.0
  %165 = vmatprep.subr.mxu0 0.0
  %166 = vmatpush2.msra.mxu0 0.0
  %167 = vmatprep.subr.mxu0 0.0
  %168 = vmatpush2.msra.mxu0 0.0
  %169 = vmatprep.subr.mxu0 0.0
  %170 = vmatpush2.msra.mxu0 0.0
  %171 = vmatprep.subr.mxu0 0.0
  %172 = vmatpush2.msra.mxu0 0.0
  %173 = vmatprep.subr.mxu0 0.0
  %174 = vmatpush2.msra.mxu0 0.0
  %175 = vmatprep.subr.mxu0 0.0
  %176 = vmatpush2.msra.mxu0 0.0
  %177 = vmatprep.subr.mxu0 0.0
  %178 = vmatpush2.msra.mxu0 0.0
  %179 = vmatprep.subr.mxu0 0.0
  %180 = vmatpush2.msra.mxu0 0.0
  %181 = vmatprep.subr.mxu0 0.0
  %182 = vmatpush2.msra.mxu0 0.0
  %183 = vmatprep.subr.mxu0 0.0
  %184 = vmatpush2.msra.mxu0 0.0
  %185 = vmatprep.subr.mxu0 0.0
  %186 = vmatpush2.msra.mxu0 0.0
  %187 = vmatprep.mubr.f32.mxu0 0.0
  %188 = vmatmul.mubr.f32.gmra.mxu0 %v106
  %v189 = vpop.f32.mrf.mxu0
  %v190 = vadd.f32 128.0, %v189
  %v191 = vpop.f32.mrf.mxu0
  %192 = vdwg.mxu0
  %193 = vst [vmem:[%s3] sm:$0xf] %v190
  // Predicated region
  $region14: #{jpeg_diff_forward.5} parent=0 // pred_check
    _
  $region15: #{jpeg_diff_forward.5} parent=0 // pred_check_branch
    %195 = sbr.rel (0) target = $region17
  $region16: #{jpeg_diff_forward.5} parent=0 // pred_region
    _
  $region17: #{jpeg_diff_forward.5} parent=0 // pred_fallthru
    _
  // Predicated region
  $region18: #{jpeg_diff_forward.5} parent=0 // pred_check
    _
  $region19: #{jpeg_diff_forward.5} parent=0 // pred_check_branch
    %197 = sbr.rel (0) target = $region21
  $region20: #{jpeg_diff_forward.5} parent=0 // pred_region
    _
  $region21: #{jpeg_diff_forward.5} parent=0 // pred_fallthru
    _

// kernel: jpeg_diff_forward.6
$region0: #{jpeg_diff_forward.6}
  #allocation0 [shape = 'u32[]', space=smem, size = 0x4, offset = 0x4, fixed_abs, tag = 'smem constant byte address 0x4 - core index']
  #allocation1 [shape = 'u32[144,128]{1,0:T(1,128)}', space=vmem, size = 0x12000, scoped, tag = 'internal scratch']
  %s0 = inlined_call_operand.vmem [shape: f32[2,128], index: 0, kind: input, shape index: {}, may-alias: {0,3}]
  %s1 = inlined_call_operand.vmem [shape: f32[128,128], index: 1, kind: input, shape index: {}]
  %s2 = inlined_call_operand.vmem [shape: f32[128,128], index: 2, kind: input, shape index: {}]
  %s3 = inlined_call_operand.vmem [shape: f32[2,128], index: 3, kind: output, shape index: {}, may-alias: {0,3}]
  %s4 = sld [smem:[#allocation0]]
  $region22: #{jpeg_diff_forward.6} parent=0
    _
  %s6 = ssub.s32 1, %s4
  %s7 = scalar_select 0, %s6, %s4
  // Predicated region
  $region2: #{jpeg_diff_forward.6} parent=0 // pred_check
    _
  $region3: #{jpeg_diff_forward.6} parent=0 // pred_check_branch
    %9 = sbr.rel (0) target = $region5
  $region4: #{jpeg_diff_forward.6} parent=0 // pred_region
    _
  $region5: #{jpeg_diff_forward.6} parent=0 // pred_fallthru
    _
  // Predicated region
  $region6: #{jpeg_diff_forward.6} parent=0 // pred_check
    _
  $region7: #{jpeg_diff_forward.6} parent=0 // pred_check_branch
    %11 = sbr.rel (0) target = $region9
  $region8: #{jpeg_diff_forward.6} parent=0 // pred_region
    _
  $region9: #{jpeg_diff_forward.6} parent=0 // pred_fallthru
    _
  // Predicated region
  $region10: #{jpeg_diff_forward.6} parent=0 // pred_check
    _
  $region11: #{jpeg_diff_forward.6} parent=0 // pred_check_branch
    %13 = sbr.rel (0) target = $region13
  $region12: #{jpeg_diff_forward.6} parent=0 // pred_region
    _
  $region13: #{jpeg_diff_forward.6} parent=0 // pred_fallthru
    _
  %v14 = vld [vmem:[%s0] sm:$0x3]
  %v15 = vsub.f32 %v14, 128.0
  %v16 = vld [vmem:[%s1] sm:$0xff]
  %v17 = vld [vmem:[%s1 + $0x8] sm:$0xff]
  %v18 = vld [vmem:[%s1 + $0x10] sm:$0xff]
  %v19 = vld [vmem:[%s1 + $0x18] sm:$0xff]
  %v20 = vld [vmem:[%s1 + $0x20] sm:$0xff]
  %v21 = vld [vmem:[%s1 + $0x28] sm:$0xff]
  %v22 = vld [vmem:[%s1 + $0x30] sm:$0xff]
  %v23 = vld [vmem:[%s1 + $0x38] sm:$0xff]
  %v24 = vld [vmem:[%s1 + $0x40] sm:$0xff]
  %v25 = vld [vmem:[%s1 + $0x48] sm:$0xff]
  %v26 = vld [vmem:[%s1 + $0x50] sm:$0xff]
  %v27 = vld [vmem:[%s1 + $0x58] sm:$0xff]
  %v28 = vld [vmem:[%s1 + $0x60] sm:$0xff]
  %v29 = vld [vmem:[%s1 + $0x68] sm:$0xff]
  %v30 = vld [vmem:[%s1 + $0x70] sm:$0xff]
  %v31 = vld [vmem:[%s1 + $0x78] sm:$0xff]
  %32 = vmatprep.subr.mxu0 0.0
  %33 = vmatpush1.msra.mxu0 %v31
  %34 = vmatprep.subr.mxu0 0.0
  %35 = vmatpush1.msra.mxu0 %v30
  %36 = vmatprep.subr.mxu0 0.0
  %37 = vmatpush1.msra.mxu0 %v29
  %38 = vmatprep.subr.mxu0 0.0
  %39 = vmatpush1.msra.mxu0 %v28
  %40 = vmatprep.subr.mxu0 0.0
  %41 = vmatpush1.msra.mxu0 %v27
  %42 = vmatprep.subr.mxu0 0.0
  %43 = vmatpush1.msra.mxu0 %v26
  %44 = vmatprep.subr.mxu0 0.0
  %45 = vmatpush1.msra.mxu0 %v25
  %46 = vmatprep.subr.mxu0 0.0
  %47 = vmatpush1.msra.mxu0 %v24
  %48 = vmatprep.subr.mxu0 0.0
  %49 = vmatpush1.msra.mxu0 %v23
  %50 = vmatprep.subr.mxu0 0.0
  %51 = vmatpush1.msra.mxu0 %v22
  %52 = vmatprep.subr.mxu0 0.0
  %53 = vmatpush1.msra.mxu0 %v21
  %54 = vmatprep.subr.mxu0 0.0
  %55 = vmatpush1.msra.mxu0 %v20
  %56 = vmatprep.subr.mxu0 0.0
  %57 = vmatpush1.msra.mxu0 %v19
  %58 = vmatprep.subr.mxu0 0.0
  %59 = vmatpush1.msra.mxu0 %v18
  %60 = vmatprep.subr.mxu0 0.0
  %61 = vmatpush1.msra.mxu0 %v17
  %62 = vmatprep.subr.mxu0 0.0
  %63 = vmatpush1.msra.mxu0 %v16
  %64 = vmatprep.subr.mxu0 0.0
  %65 = vmatpush2.msra.mxu0 0.0
  %66 = vmatprep.subr.mxu0 0.0
  %67 = vmatpush2.msra.mxu0 0.0
  %68 = vmatprep.subr.mxu0 0.0
  %69 = vmatpush2.msra.mxu0 0.0
  %70 = vmatprep.subr.mxu0 0.0
  %71 = vmatpush2.msra.mxu0 0.0
  %72 = vmatprep.subr.mxu0 0.0
  %73 = vmatpush2.msra.mxu0 0.0
  %74 = vmatprep.subr.mxu0 0.0
  %75 = vmatpush2.msra.mxu0 0.0
  %76 = vmatprep.subr.mxu0 0.0
  %77 = vmatpush2.msra.mxu0 0.0
  %78 = vmatprep.subr.mxu0 0.0
  %79 = vmatpush2.msra.mxu0 0.0
  %80 = vmatprep.subr.mxu0 0.0
  %81 = vmatpush2.msra.mxu0 0.0
  %82 = vmatprep.subr.mxu0 0.0
  %83 = vmatpush2.msra.mxu0 0.0
  %84 = vmatprep.subr.mxu0 0.0
  %85 = vmatpush2.msra.mxu0 0.0
  %86 = vmatprep.subr.mxu0 0.0
  %87 = vmatpush2.msra.mxu0 0.0
  %88 = vmatprep.subr.mxu0 0.0
  %89 = vmatpush2.msra.mxu0 0.0
  %90 = vmatprep.subr.mxu0 0.0
  %91 = vmatpush2.msra.mxu0 0.0
  %92 = vmatprep.subr.mxu0 0.0
  %93 = vmatpush2.msra.mxu0 0.0
  %94 = vmatprep.subr.mxu0 0.0
  %95 = vmatpush2.msra.mxu0 0.0
  %96 = vmatprep.mubr.f32.mxu0 0.0
  %97 = vmatmul.mubr.f32.gmra.mxu0 %v15
  %v98 = vpop.f32.mrf.mxu0
  %v99 = vadd.f32 0.0, %v98
  %v100 = vpop.f32.mrf.mxu0
  %101 = vdwg.mxu0
  %v102 = vround.ne.pseudo %v99
  %v103 = vsub.f32 %v99, %v102
  %v104 = vmul.f32 %v103, %v103
  %v105 = vmul.f32 %v103, %v104
  %v106 = vadd.f32 %v102, %v105
  %v107 = vld [vmem:[%s2] sm:$0xff]
  %v108 = vld [vmem:[%s2 + $0x8] sm:$0xff]
  %v109 = vld [vmem:[%s2 + $0x10] sm:$0xff]
  %v110 = vld [vmem:[%s2 + $0x18] sm:$0xff]
  %v111 = vld [vmem:[%s2 + $0x20] sm:$0xff]
  %v112 = vld [vmem:[%s2 + $0x28] sm:$0xff]
  %v113 = vld [vmem:[%s2 + $0x30] sm:$0xff]
  %v114 = vld [vmem:[%s2 + $0x38] sm:$0xff]
  %v115 = vld [vmem:[%s2 + $0x40] sm:$0xff]
  %v116 = vld [vmem:[%s2 + $0x48] sm:$0xff]
  %v117 = vld [vmem:[%s2 + $0x50] sm:$0xff]
  %v118 = vld [vmem:[%s2 + $0x58] sm:$0xff]
  %v119 = vld [vmem:[%s2 + $0x60] sm:$0xff]
  %v120 = vld [vmem:[%s2 + $0x68] sm:$0xff]
  %v121 = vld [vmem:[%s2 + $0x70] sm:$0xff]
  %v122 = vld [vmem:[%s2 + $0x78] sm:$0xff]
  %123 = vmatprep.subr.mxu0 0.0
  %124 = vmatpush1.msra.mxu0 %v122
  %125 = vmatprep.subr.mxu0 0.0
  %126 = vmatpush1.msra.mxu0 %v121
  %127 = vmatprep.subr.mxu0 0.0
  %128 = vmatpush1.msra.mxu0 %v120
  %129 = vmatprep.subr.mxu0 0.0
  %130 = vmatpush1.msra.mxu0 %v119
  %131 = vmatprep.subr.mxu0 0.0
  %132 = vmatpush1.msra.mxu0 %v118
  %133 = vmatprep.subr.mxu0 0.0
  %134 = vmatpush1.msra.mxu0 %v117
  %135 = vmatprep.subr.mxu0 0.0
  %136 = vmatpush1.msra.mxu0 %v116
  %137 = vmatprep.subr.mxu0 0.0
  %138 = vmatpush1.msra.mxu0 %v115
  %139 = vmatprep.subr.mxu0 0.0
  %140 = vmatpush1.msra.mxu0 %v114
  %141 = vmatprep.subr.mxu0 0.0
  %142 = vmatpush1.msra.mxu0 %v113
  %143 = vmatprep.subr.mxu0 0.0
  %144 = vmatpush1.msra.mxu0 %v112
  %145 = vmatprep.subr.mxu0 0.0
  %146 = vmatpush1.msra.mxu0 %v111
  %147 = vmatprep.subr.mxu0 0.0
  %148 = vmatpush1.msra.mxu0 %v110
  %149 = vmatprep.subr.mxu0 0.0
  %150 = vmatpush1.msra.mxu0 %v109
  %151 = vmatprep.subr.mxu0 0.0
  %152 = vmatpush1.msra.mxu0 %v108
  %153 = vmatprep.subr.mxu0 0.0
  %154 = vmatpush1.msra.mxu0 %v107
  %155 = vmatprep.subr.mxu0 0.0
  %156 = vmatpush2.msra.mxu0 0.0
  %157 = vmatprep.subr.mxu0 0.0
  %158 = vmatpush2.msra.mxu0 0.0
  %159 = vmatprep.subr.mxu0 0.0
  %160 = vmatpush2.msra.mxu0 0.0
  %161 = vmatprep.subr.mxu0 0.0
  %162 = vmatpush2.msra.mxu0 0.0
  %163 = vmatprep.subr.mxu0 0.0
  %164 = vmatpush2.msra.mxu0 0.0
  %165 = vmatprep.subr.mxu0 0.0
  %166 = vmatpush2.msra.mxu0 0.0
  %167 = vmatprep.subr.mxu0 0.0
  %168 = vmatpush2.msra.mxu0 0.0
  %169 = vmatprep.subr.mxu0 0.0
  %170 = vmatpush2.msra.mxu0 0.0
  %171 = vmatprep.subr.mxu0 0.0
  %172 = vmatpush2.msra.mxu0 0.0
  %173 = vmatprep.subr.mxu0 0.0
  %174 = vmatpush2.msra.mxu0 0.0
  %175 = vmatprep.subr.mxu0 0.0
  %176 = vmatpush2.msra.mxu0 0.0
  %177 = vmatprep.subr.mxu0 0.0
  %178 = vmatpush2.msra.mxu0 0.0
  %179 = vmatprep.subr.mxu0 0.0
  %180 = vmatpush2.msra.mxu0 0.0
  %181 = vmatprep.subr.mxu0 0.0
  %182 = vmatpush2.msra.mxu0 0.0
  %183 = vmatprep.subr.mxu0 0.0
  %184 = vmatpush2.msra.mxu0 0.0
  %185 = vmatprep.subr.mxu0 0.0
  %186 = vmatpush2.msra.mxu0 0.0
  %187 = vmatprep.mubr.f32.mxu0 0.0
  %188 = vmatmul.mubr.f32.gmra.mxu0 %v106
  %v189 = vpop.f32.mrf.mxu0
  %v190 = vadd.f32 128.0, %v189
  %v191 = vpop.f32.mrf.mxu0
  %192 = vdwg.mxu0
  %193 = vst [vmem:[%s3] sm:$0x3] %v190
  // Predicated region
  $region14: #{jpeg_diff_forward.6} parent=0 // pred_check
    _
  $region15: #{jpeg_diff_forward.6} parent=0 // pred_check_branch
    %195 = sbr.rel (0) target = $region17
  $region16: #{jpeg_diff_forward.6} parent=0 // pred_region
    _
  $region17: #{jpeg_diff_forward.6} parent=0 // pred_fallthru
    _
  // Predicated region
  $region18: #{jpeg_diff_forward.6} parent=0 // pred_check
    _
  $region19: #{jpeg_diff_forward.6} parent=0 // pred_check_branch
    %197 = sbr.rel (0) target = $region21
  $region20: #{jpeg_diff_forward.6} parent=0 // pred_region
    _
  $region21: #{jpeg_diff_forward.6} parent=0 // pred_fallthru
    _

// kernel: jpeg_diff_forward.7
$region0: #{jpeg_diff_forward.7}
  #allocation0 [shape = 'u32[]', space=smem, size = 0x4, offset = 0x4, fixed_abs, tag = 'smem constant byte address 0x4 - core index']
  #allocation1 [shape = 'u32[144,128]{1,0:T(1,128)}', space=vmem, size = 0x12000, scoped, tag = 'internal scratch']
  %s0 = inlined_call_operand.vmem [shape: f32[4,128], index: 0, kind: input, shape index: {}, may-alias: {0,3}]
  %s1 = inlined_call_operand.vmem [shape: f32[4,128], index: 1, kind: input, shape index: {}, may-alias: {1,4}]
  %s2 = inlined_call_operand.vmem [shape: f32[4,128], index: 2, kind: input, shape index: {}, may-alias: {2,5}]
  %s3 = inlined_call_operand.vmem [shape: f32[4,128], index: 3, kind: output, shape index: {0}, may-alias: {0,3}]
  %s4 = inlined_call_operand.vmem [shape: f32[4,128], index: 4, kind: output, shape index: {1}, may-alias: {1,4}]
  %s5 = inlined_call_operand.vmem [shape: f32[4,128], index: 5, kind: output, shape index: {2}, may-alias: {2,5}]
  %6 = xla_tuple %s3, %s4, %s5
  %s7 = sld [smem:[#allocation0]]
  $region38: #{jpeg_diff_forward.7} parent=0
    _
  %s9 = ssub.s32 1, %s7
  %s10 = scalar_select 0, %s9, %s7
  // Predicated region
  $region2: #{jpeg_diff_forward.7} parent=0 // pred_check
    _
  $region3: #{jpeg_diff_forward.7} parent=0 // pred_check_branch
    %12 = sbr.rel (0) target = $region5
  $region4: #{jpeg_diff_forward.7} parent=0 // pred_region
    _
  $region5: #{jpeg_diff_forward.7} parent=0 // pred_fallthru
    _
  // Predicated region
  $region6: #{jpeg_diff_forward.7} parent=0 // pred_check
    _
  $region7: #{jpeg_diff_forward.7} parent=0 // pred_check_branch
    %14 = sbr.rel (0) target = $region9
  $region8: #{jpeg_diff_forward.7} parent=0 // pred_region
    _
  $region9: #{jpeg_diff_forward.7} parent=0 // pred_fallthru
    _
  // Predicated region
  $region10: #{jpeg_diff_forward.7} parent=0 // pred_check
    _
  $region11: #{jpeg_diff_forward.7} parent=0 // pred_check_branch
    %16 = sbr.rel (0) target = $region13
  $region12: #{jpeg_diff_forward.7} parent=0 // pred_region
    _
  $region13: #{jpeg_diff_forward.7} parent=0 // pred_fallthru
    _
  %v17 = vld [vmem:[%s0] sm:$0xf]
  %v18 = vld [vmem:[%s1] sm:$0xf]
  %v19 = vsub.f32 %v18, 128.0
  %v20 = vld [vmem:[%s2] sm:$0xf]
  %v21 = vsub.f32 %v20, 128.0
  %v22 = vmul.f32 %v21, 1.402
  %v23 = vadd.f32 %v17, %v22
  %v24 = vmul.f32 %v19, 0.344136
  %v25 = vsub.f32 %v17, %v24
  %v26 = vmul.f32 %v21, 0.714136
  %v27 = vsub.f32 %v25, %v26
  %v28 = vmul.f32 %v19, 1.772
  %v29 = vadd.f32 %v17, %v28
  %v30 = vmax.f32 %v23, 0.0
  %v31 = vmin.f32 %v30, 255.0
  %v32 = vmul.f32 %v31, 0.007843138
  %v33 = vsub.f32 %v32, 1.0
  %34 = vst [vmem:[%s3] sm:$0xf] %v33
  %v35 = vmax.f32 %v27, 0.0
  %v36 = vmin.f32 %v35, 255.0
  %v37 = vmul.f32 %v36, 0.007843138
  %v38 = vsub.f32 %v37, 1.0
  %39 = vst [vmem:[%s4] sm:$0xf] %v38
  %v40 = vmax.f32 %v29, 0.0
  %v41 = vmin.f32 %v40, 255.0
  %v42 = vmul.f32 %v41, 0.007843138
  %v43 = vsub.f32 %v42, 1.0
  %44 = vst [vmem:[%s5] sm:$0xf] %v43
  // Predicated region
  $region14: #{jpeg_diff_forward.7} parent=0 // pred_check
    _
  $region15: #{jpeg_diff_forward.7} parent=0 // pred_check_branch
    %46 = sbr.rel (0) target = $region17
  $region16: #{jpeg_diff_forward.7} parent=0 // pred_region
    _
  $region17: #{jpeg_diff_forward.7} parent=0 // pred_fallthru
    _
  // Predicated region
  $region18: #{jpeg_diff_forward.7} parent=0 // pred_check
    _
  $region19: #{jpeg_diff_forward.7} parent=0 // pred_check_branch
    %48 = sbr.rel (0) target = $region21
  $region20: #{jpeg_diff_forward.7} parent=0 // pred_region
    _
  $region21: #{jpeg_diff_forward.7} parent=0 // pred_fallthru
    _
  // Predicated region
  $region22: #{jpeg_diff_forward.7} parent=0 // pred_check
    _
  $region23: #{jpeg_diff_forward.7} parent=0 // pred_check_branch
    %50 = sbr.rel (0) target = $region25
  $region24: #{jpeg_diff_forward.7} parent=0 // pred_region
    _
  $region25: #{jpeg_diff_forward.7} parent=0 // pred_fallthru
    _
  // Predicated region
  $region26: #{jpeg_diff_forward.7} parent=0 // pred_check
    _
  $region27: #{jpeg_diff_forward.7} parent=0 // pred_check_branch
    %52 = sbr.rel (0) target = $region29
  $region28: #{jpeg_diff_forward.7} parent=0 // pred_region
    _
  $region29: #{jpeg_diff_forward.7} parent=0 // pred_fallthru
    _
  // Predicated region
  $region30: #{jpeg_diff_forward.7} parent=0 // pred_check
    _
  $region31: #{jpeg_diff_forward.7} parent=0 // pred_check_branch
    %54 = sbr.rel (0) target = $region33
  $region32: #{jpeg_diff_forward.7} parent=0 // pred_region
    _
  $region33: #{jpeg_diff_forward.7} parent=0 // pred_fallthru
    _
  // Predicated region
  $region34: #{jpeg_diff_forward.7} parent=0 // pred_check
    _
  $region35: #{jpeg_diff_forward.7} parent=0 // pred_check_branch
    %56 = sbr.rel (0) target = $region37
  $region36: #{jpeg_diff_forward.7} parent=0 // pred_region
    _
  $region37: #{jpeg_diff_forward.7} parent=0 // pred_fallthru
    _

</llo_original>
